<compile_context>
chip_gen: v5e
topology: v5e:2x2
jax: 0.10.0
libtpu: 0.0.40
codegen_flags: <defaults>
</compile_context>

<pallas_src>
import functools

import jax
import jax.numpy as jnp
from jax import lax
from jax.experimental import pallas as pl
from jax.experimental.pallas import tpu as pltpu

_NEG_INF = -1e30
_MAX_TILE = 256                       # rows per dst/src tile once non-toy
_VMEM_LIMIT = 48 * 1024 * 1024        # > default scoped limit on v5e/v6e/v7x


def _round_up(x, m):
    return (x + m - 1) // m * m


def _pick_tile(n):
    n8 = _round_up(n, 8)
    return n8 if n8 <= _MAX_TILE else _MAX_TILE   # multiple of 8 (and of 128 when >1 tile)


def _pad2(a, rows, cols):
    pr, pc = rows - a.shape[0], cols - a.shape[1]
    if pr or pc:
        a = jnp.pad(a, ((0, pr), (0, pc)))
    return a


def _block_diag_rows(attn, fout):
    """(H, fout) -> (H, H*fout); row h holds attn[h] in block h, zeros elsewhere."""
    h = attn.shape[0]
    eye = jnp.eye(h, dtype=attn.dtype)
    return (eye[:, :, None] * attn[:, None, :]).reshape(h, h * fout)


# ---------------------------------------------------------------------------
# Kernel 1: shared projection, tiled over source rows.
#   feat[s]  = x[s] @ W                        (bf16 operands, f32 accumulation)
#   el[h, s] = <attn_l[h], feat[s, h-block]>   (MXU, produced lane-oriented)
# ---------------------------------------------------------------------------
def _proj_kernel(x_ref, w_ref, al_ref, feat_ref, el_ref):
    feat = jnp.dot(x_ref[...], w_ref[...], preferred_element_type=jnp.float32)
    feat_bf = feat.astype(jnp.bfloat16)
    feat_ref[...] = feat_bf
    el_ref[...] = lax.dot_general(al_ref[...], feat_bf, (((1,), (1,)), ((), ())),
                                  preferred_element_type=jnp.float32)


# ---------------------------------------------------------------------------
# Kernel 2: edge attention + softmax + aggregation, tiled over destination rows.
# ---------------------------------------------------------------------------
def _attn_kernel(adj_ref, featd_ref, feat_ref, el_ref, ar_ref, b_ref, out_ref,
                 *, heads, fout, attn_slope, out_slope):
    adj = adj_ref[...]                                   # (T, Nsrc) bf16
    edge = adj > 0                                       # hoisted once per tile
    feat = feat_ref[...]                                 # (Nsrc, H*fout) bf16
    el_all = el_ref[...]                                 # (H, Nsrc) f32
    # er[d, h] = <attn_r[h], feat_dst[d, h-block]>; dst rows = this tile's rows.
    er_cols = lax.dot_general(featd_ref[...], ar_ref[...], (((1,), (1,)), ((), ())),
                              preferred_element_type=jnp.float32)   # (T, H)

    t = adj.shape[0]
    acc = jnp.zeros((t, fout), jnp.float32)
    for h in range(heads):                               # heads static & small
        logits = er_cols[:, h:h + 1] + el_all[h:h + 1, :]            # (T, Nsrc)
        e = jnp.where(logits > 0, logits, attn_slope * logits)       # leaky relu
        e = jnp.where(edge, e, _NEG_INF)                             # mask fused
        m = jnp.max(e, axis=-1, keepdims=True)
        p = jnp.exp(e - m)
        s = jnp.sum(p, axis=-1, keepdims=True)
        inv = pl.reciprocal(s, approx=True)                          # EUP
        inv = jnp.where(m > 0.5 * _NEG_INF, inv, 0.0)                # 0 in-degree -> 0
        alpha = (p * inv).astype(jnp.bfloat16)
        acc = acc + jnp.dot(alpha, feat[:, h * fout:(h + 1) * fout],
                            preferred_element_type=jnp.float32)

    res = acc * (1.0 / heads) + b_ref[...]               # mean over heads + mean_h(bias)
    if out_slope is not None:                            # inter-layer F.leaky_relu
        res = jnp.where(res > 0, res, out_slope * res)
    out_ref[...] = res.astype(out_ref.dtype)


def _gat_layer(h_src, adj, p, *, attn_slope, out_slope, out_dtype):
    """One GATConv (eval mode) + mean over heads: projection call + attention call."""
    heads, fout = p["num_heads"], p["out_feats"]
    n_dst, n_src = adj.shape
    assert h_src.shape[0] == n_src, "block src count must match feature rows"
    fin = h_src.shape[1]
    hf = heads * fout

    # Tiling + padding (tile rows multiples of 8; dst rows are a prefix of src rows).
    tile_dst = _pick_tile(n_dst)
    n_dst_pad = _round_up(n_dst, tile_dst)
    n_src_eff = max(n_src, n_dst_pad)
    tile_src = _pick_tile(n_src_eff)
    n_src_pad = _round_up(n_src_eff, tile_src)

    x = _pad2(h_src.astype(jnp.bfloat16), n_src_pad, fin)
    adj_bf = _pad2(adj.astype(jnp.bfloat16), n_dst_pad, n_src_pad)

    w_bf = p["w"].astype(jnp.bfloat16)
    al_bf = _block_diag_rows(p["attn_l"], fout).astype(jnp.bfloat16)
    ar_bf = _block_diag_rows(p["attn_r"], fout).astype(jnp.bfloat16)
    b_mean = p["bias"].reshape(heads, fout).mean(axis=0, keepdims=True).astype(jnp.float32)

    # ---- projection: grid over src tiles -------------------------------------
    feat_bf, el = pl.pallas_call(
        _proj_kernel,
        grid=(n_src_pad // tile_src,),
        in_specs=[pl.BlockSpec((tile_src, fin), lambda i: (i, 0)),
                  pl.BlockSpec((fin, hf), lambda i: (0, 0)),
                  pl.BlockSpec((heads, hf), lambda i: (0, 0))],
        out_specs=(pl.BlockSpec((tile_src, hf), lambda i: (i, 0)),
                   pl.BlockSpec((heads, tile_src), lambda i: (0, i))),
        out_shape=(jax.ShapeDtypeStruct((n_src_pad, hf), jnp.bfloat16),
                   jax.ShapeDtypeStruct((heads, n_src_pad), jnp.float32)),
        compiler_params=pltpu.CompilerParams(
            dimension_semantics=("parallel",)),
    )(x, w_bf, al_bf)

    # ---- attention + aggregation: grid over dst tiles -------------------------
    kernel = functools.partial(_attn_kernel, heads=heads, fout=fout,
                               attn_slope=attn_slope, out_slope=out_slope)
    out = pl.pallas_call(
        kernel,
        grid=(n_dst_pad // tile_dst,),
        in_specs=[pl.BlockSpec((tile_dst, n_src_pad), lambda i: (i, 0)),   # adj tile
                  pl.BlockSpec((tile_dst, hf), lambda i: (i, 0)),          # feat, dst rows
                  pl.BlockSpec((n_src_pad, hf), lambda i: (0, 0)),         # feat, all src
                  pl.BlockSpec((heads, n_src_pad), lambda i: (0, 0)),      # el
                  pl.BlockSpec((heads, hf), lambda i: (0, 0)),             # attn_r blocks
                  pl.BlockSpec((1, fout), lambda i: (0, 0))],              # mean bias
        out_specs=pl.BlockSpec((tile_dst, fout), lambda i: (i, 0)),
        out_shape=jax.ShapeDtypeStruct((n_dst_pad, fout), out_dtype),
        compiler_params=pltpu.CompilerParams(
            dimension_semantics=("parallel",),
            vmem_limit_bytes=_VMEM_LIMIT),
    )(adj_bf, feat_bf, feat_bf, el, ar_bf, b_mean)

    return out[:n_dst]


def gat_forward(blocks, x, params):
    """Mirrors GAT.forward: GATConv -> mean over heads per layer; F.leaky_relu
    between layers, none after the last."""
    assert len(blocks) == len(params)
    h = x
    n_layers = len(params)
    for li, (blk, p) in enumerate(zip(blocks, params)):
        is_last = li == n_layers - 1
        h = _gat_layer(h, blk, p,
                       attn_slope=0.2,                        # DGL GATConv default
                       out_slope=None if is_last else 0.01,   # F.leaky_relu default
                       out_dtype=jnp.float32 if is_last else jnp.bfloat16)
    return h


def init_gat_params(key, in_feats, hidden_dims, num_heads):
    params = []
    dims = [in_feats] + list(hidden_dims)
    for i in range(len(hidden_dims)):
        key, kw, kl, kr = jax.random.split(key, 4)
        fin, fout = dims[i], dims[i + 1]
        params.append(dict(
            w=jax.random.normal(kw, (fin, num_heads * fout), jnp.float32)
              * (1.0 / jnp.sqrt(jnp.float32(fin))),
            attn_l=jax.random.normal(kl, (num_heads, fout), jnp.float32) * 0.1,
            attn_r=jax.random.normal(kr, (num_heads, fout), jnp.float32) * 0.1,
            bias=jnp.zeros((1, num_heads * fout), jnp.float32),
            num_heads=num_heads,
            out_feats=fout,
        ))
    return params


if __name__ == "__main__":
    key = jax.random.PRNGKey(0)
    k_x, k_adj, k_p = jax.random.split(key, 3)

    N = 64                      # number of graph nodes
    in_feats = 16
    hidden_dims = [32, 32]      # num_layers = 2
    num_heads = 2

    x = jax.random.normal(k_x, (N, in_feats), jnp.float32)

    # blocks: dense adjacency (dst rows, src cols); add self-loops so no node
    # has zero in-degree (the allow_zero_in_degree path is still handled in-kernel).
    adj = (jax.random.uniform(k_adj, (N, N)) < 0.2).astype(jnp.float32)
    adj = jnp.maximum(adj, jnp.eye(N, dtype=jnp.float32))
    blocks = [adj, adj]

    params = init_gat_params(k_p, in_feats, hidden_dims, num_heads)

    out = gat_forward(blocks, x, params)
    jax.block_until_ready(out)
    assert out.shape == (N, hidden_dims[-1])
    print("KERNEL_OK")
</pallas_src>

<mosaic_0001>
module attributes {stable_mosaic.version = 11 : i64} {
  func.func @_proj_kernel(%arg0: i32, %arg1: memref<64x16xbf16, #tpu.memory_space<vmem>>, %arg2: memref<16x64xbf16, #tpu.memory_space<vmem>>, %arg3: memref<2x64xbf16, #tpu.memory_space<vmem>>, %arg4: memref<64x64xbf16, #tpu.memory_space<vmem>>, %arg5: memref<2x64xf32, #tpu.memory_space<vmem>>) attributes {dimension_semantics = [#tpu.dimension_semantics<parallel>], iteration_bounds = array<i64: 1>, scalar_prefetch = 0 : i64, scratch_operands = 0 : i64, tpu.core_type = #tpu.core_type<tc>, window_params = [{transform_indices = @transform_0, window_bounds = array<i64: 64, 16>}, {pipeline_mode = #tpu.pipeline_mode<synchronous>, transform_indices = @transform_1, window_bounds = array<i64: 16, 64>}, {pipeline_mode = #tpu.pipeline_mode<synchronous>, transform_indices = @transform_2, window_bounds = array<i64: 2, 64>}, {transform_indices = @transform_3, window_bounds = array<i64: 64, 64>}, {transform_indices = @transform_4, window_bounds = array<i64: 2, 64>}]} {
    %c0 = arith.constant 0 : index
    %c0_0 = arith.constant 0 : index
    %0 = vector.load %arg1[%c0, %c0_0] : memref<64x16xbf16, #tpu.memory_space<vmem>>, vector<64x16xbf16>
    %c0_1 = arith.constant 0 : index
    %c0_2 = arith.constant 0 : index
    %1 = vector.load %arg2[%c0_1, %c0_2] : memref<16x64xbf16, #tpu.memory_space<vmem>>, vector<16x64xbf16>
    %cst = arith.constant dense<0.000000e+00> : vector<64x64xf32>
    %2 = tpu.matmul %0, %1, %cst {dimension_numbers = #tpu.dot_dimension_numbers<[1], [0], [0], [1], [0, 0, 1, 1], [], []>} : vector<64x16xbf16>, vector<16x64xbf16>, vector<64x64xf32> -> vector<64x64xf32>
    %3 = arith.truncf %2 : vector<64x64xf32> to vector<64x64xbf16>
    %c0_3 = arith.constant 0 : index
    %c0_4 = arith.constant 0 : index
    %4 = vector.load %arg4[%c0_3, %c0_4] : memref<64x64xbf16, #tpu.memory_space<vmem>>, vector<64x64xbf16>
    tpu.vector_store %arg4[%c0_3, %c0_4], %3 {strides = array<i32>} : memref<64x64xbf16, #tpu.memory_space<vmem>>, vector<64x64xbf16>,
    %c0_5 = arith.constant 0 : index
    %c0_6 = arith.constant 0 : index
    %5 = vector.load %arg3[%c0_5, %c0_6] : memref<2x64xbf16, #tpu.memory_space<vmem>>, vector<2x64xbf16>
    %cst_7 = arith.constant dense<0.000000e+00> : vector<2x64xf32>
    %6 = tpu.matmul %5, %3, %cst_7 {dimension_numbers = #tpu.dot_dimension_numbers<[1], [1], [0], [0], [0, 0, 1, 0], [], []>} : vector<2x64xbf16>, vector<64x64xbf16>, vector<2x64xf32> -> vector<2x64xf32>
    %c0_8 = arith.constant 0 : index
    %c0_9 = arith.constant 0 : index
    %7 = vector.load %arg5[%c0_8, %c0_9] : memref<2x64xf32, #tpu.memory_space<vmem>>, vector<2x64xf32>
    tpu.vector_store %arg5[%c0_8, %c0_9], %6 {strides = array<i32>} : memref<2x64xf32, #tpu.memory_space<vmem>>, vector<2x64xf32>,
    return
  }
  func.func @transform_0(%arg0: i32) -> (i32, i32) {
    %c0_i32 = arith.constant 0 : i32
    %c0_i32_0 = arith.constant 0 : i32
    return %arg0, %c0_i32 : i32, i32
  }
  func.func @transform_1(%arg0: i32) -> (i32, i32) {
    %c0_i32 = arith.constant 0 : i32
    %c0_i32_0 = arith.constant 0 : i32
    %c0_i32_1 = arith.constant 0 : i32
    return %c0_i32, %c0_i32_0 : i32, i32
  }
  func.func @transform_2(%arg0: i32) -> (i32, i32) {
    %c0_i32 = arith.constant 0 : i32
    %c0_i32_0 = arith.constant 0 : i32
    %c0_i32_1 = arith.constant 0 : i32
    return %c0_i32, %c0_i32_0 : i32, i32
  }
  func.func @transform_3(%arg0: i32) -> (i32, i32) {
    %c0_i32 = arith.constant 0 : i32
    %c0_i32_0 = arith.constant 0 : i32
    return %arg0, %c0_i32 : i32, i32
  }
  func.func @transform_4(%arg0: i32) -> (i32, i32) {
    %c0_i32 = arith.constant 0 : i32
    %c0_i32_0 = arith.constant 0 : i32
    return %c0_i32, %arg0 : i32, i32
  }
}

</mosaic_0001>

<llo_original>
// kernel: tpu_custom_call.1
$region0: #{tpu_custom_call.1}
  #allocation0 [shape = 'u32[]', space=smem, size = 0x4, offset = 0x4, fixed_abs, tag = 'smem constant byte address 0x4 - core index']
  #allocation1 [shape = 'u32[72,128]{1,0:T(1,128)}', space=vmem, size = 0x9000, scoped, tag = 'internal scratch']
  %s0 = inlined_call_operand.vmem [shape: bf16[64,16], index: 0, kind: input, shape index: {}]
  %s1 = inlined_call_operand.vmem [shape: bf16[16,64], index: 1, kind: input, shape index: {}]
  %s2 = inlined_call_operand.vmem [shape: bf16[2,64], index: 2, kind: input, shape index: {}]
  %s3 = inlined_call_operand.hbm [shape: bf16[64,64], index: 3, kind: output, shape index: {0}]
  %s4 = inlined_call_operand.hbm [shape: f32[2,64], index: 4, kind: output, shape index: {1}]
  %5 = xla_tuple %s3, %s4
  %s6 = sld [smem:[#allocation0]]
  $region30: #{tpu_custom_call.1} parent=0
    _
  %s8 = ssub.s32 1, %s6
  %s9 = scalar_select 0, %s8, %s6
  $region1: #{tpu_custom_call.1} parent=0
    #allocation2 [shape = 'u8[16384]{0}', space=vmem, size = 0x4000, scoped, tag = 'output window, operand 0, single buffered']
    #allocation3 [shape = 's32[1]{0}', space=sflag, size = 0x4, scoped, tag = 'scoped memory for tpu_custom_call.1']
    #allocation4 [shape = 'u8[1024]{0}', space=vmem, size = 0x400, scoped, tag = 'output window, operand 1, single buffered']
    #allocation5 [shape = 's32[1]{0}', space=sflag, size = 0x4, scoped, tag = 'scoped memory for tpu_custom_call.1']
    %10 = vsyncpa [#allocation3], 0
    %11 = vsyncpa [#allocation5], 0
    // Predicated region
    $region2: #{tpu_custom_call.1} parent=1 // pred_check
      _
    $region3: #{tpu_custom_call.1} parent=1 // pred_check_branch
      %13 = sbr.rel (0) target = $region5
    $region4: #{tpu_custom_call.1} parent=1 // pred_region
      _
    $region5: #{tpu_custom_call.1} parent=1 // pred_fallthru
      _
    // Predicated region
    $region6: #{tpu_custom_call.1} parent=1 // pred_check
      _
    $region7: #{tpu_custom_call.1} parent=1 // pred_check_branch
      %15 = sbr.rel (0) target = $region9
    $region8: #{tpu_custom_call.1} parent=1 // pred_region
      _
    $region9: #{tpu_custom_call.1} parent=1 // pred_fallthru
      _
    // Predicated region
    $region10: #{tpu_custom_call.1} parent=1 // pred_check
      _
    $region11: #{tpu_custom_call.1} parent=1 // pred_check_branch
      %17 = sbr.rel (0) target = $region13
    $region12: #{tpu_custom_call.1} parent=1 // pred_region
      _
    $region13: #{tpu_custom_call.1} parent=1 // pred_fallthru
      _
    %v19 = vld [vmem:[%s0] sm:$0xf]
    %v20 = vld [vmem:[%s0 + $0x4] sm:$0xf]
    %v21 = vld [vmem:[%s0 + $0x8] sm:$0xf]
    %v22 = vld [vmem:[%s0 + $0xc] sm:$0xf]
    %v23 = vld [vmem:[%s0 + $0x10] sm:$0xf]
    %v24 = vld [vmem:[%s0 + $0x14] sm:$0xf]
    %v25 = vld [vmem:[%s0 + $0x18] sm:$0xf]
    %v26 = vld [vmem:[%s0 + $0x1c] sm:$0xf]
    %v27 = vld [vmem:[%s1] sm:$0xf]
    %v28 = vld [vmem:[%s1 + $0x4] sm:$0xf]
    %v37 = vunpack.c.l.b16 %v19
    %v38 = vunpack.c.l.b16 %v20
    %v39 = vunpack.c.l.b16 %v21
    %v40 = vunpack.c.l.b16 %v22
    %v41 = vunpack.c.l.b16 %v23
    %v42 = vunpack.c.l.b16 %v24
    %v43 = vunpack.c.l.b16 %v25
    %v44 = vunpack.c.l.b16 %v26
    %v45 = vpack.c.b16 %v38, %v37
    %v46 = vpack.c.b16 %v40, %v39
    %v47 = vpack.c.b16 %v42, %v41
    %v48 = vpack.c.b16 %v44, %v43
    %v51 = vunpack.c.l.b16 %v27
    %v52 = vunpack.c.l.b16 %v28
    %v53 = vpack.c.b16 %v52, %v51
    %vm55 = vcmask 130048
    %v57 = vsel %vm55, %v45, 0
    %v60 = vsel %vm55, %v46, 0
    %v63 = vsel %vm55, %v47, 0
    %v66 = vsel %vm55, %v48, 0
    %68 = vmatpush.bf16.msra.mxu0 0
    %69 = vmatpush.bf16.msra.mxu0 0
    %70 = vmatpush.bf16.msra.mxu0 0
    %71 = vmatpush.bf16.msra.mxu0 0
    %72 = vmatpush.bf16.msra.mxu0 0
    %73 = vmatpush.bf16.msra.mxu0 0
    %74 = vmatpush.bf16.msra.mxu0 0
    %75 = vmatpush.bf16.msra.mxu0 %v53
    %76 = vmatmul.bf16.gmra.mxu0 %v57
    %v77 = vpop.f32.mrf.mxu0
    %v78 = vadd.f32 0.0, %v77
    %v79 = vpop.f32.mrf.mxu0
    %v80 = vadd.f32 0.0, %v79
    %81 = vmatmul.bf16.gmra.mxu0 %v60
    %v82 = vpop.f32.mrf.mxu0
    %v83 = vadd.f32 0.0, %v82
    %v84 = vpop.f32.mrf.mxu0
    %v85 = vadd.f32 0.0, %v84
    %86 = vmatmul.bf16.gmra.mxu0 %v63
    %v87 = vpop.f32.mrf.mxu0
    %v88 = vadd.f32 0.0, %v87
    %v89 = vpop.f32.mrf.mxu0
    %v90 = vadd.f32 0.0, %v89
    %91 = vmatmul.bf16.gmra.mxu0 %v66
    %v92 = vpop.f32.mrf.mxu0
    %v93 = vadd.f32 0.0, %v92
    %v94 = vpop.f32.mrf.mxu0
    %v95 = vadd.f32 0.0, %v94
    %96 = vdwg.mxu0
    %v97 = vpack.c.bf16 %v78, %v78
    %v98 = vpack.c.bf16 %v80, %v80
    %v99 = vpack.c.bf16 %v83, %v83
    %v100 = vpack.c.bf16 %v85, %v85
    %v101 = vpack.c.bf16 %v88, %v88
    %v102 = vpack.c.bf16 %v90, %v90
    %v103 = vpack.c.bf16 %v93, %v93
    %v104 = vpack.c.bf16 %v95, %v95
    %vm105 = vcmask 519168
    %106 = vst.msk [vmem:[#allocation2] sm:$0xf] %vm105, %v97
    %107 = vst.msk [vmem:[#allocation2 + $0x4] sm:$0xf] %vm105, %v98
    %108 = vst.msk [vmem:[#allocation2 + $0x8] sm:$0xf] %vm105, %v99
    %109 = vst.msk [vmem:[#allocation2 + $0xc] sm:$0xf] %vm105, %v100
    %110 = vst.msk [vmem:[#allocation2 + $0x10] sm:$0xf] %vm105, %v101
    %111 = vst.msk [vmem:[#allocation2 + $0x14] sm:$0xf] %vm105, %v102
    %112 = vst.msk [vmem:[#allocation2 + $0x18] sm:$0xf] %vm105, %v103
    %113 = vst.msk [vmem:[#allocation2 + $0x1c] sm:$0xf] %vm105, %v104
    %v114 = vld [vmem:[%s2] sm:$0x1]
    %v123 = vunpack.c.l.b16 %v97
    %v124 = vunpack.c.l.b16 %v98
    %v125 = vunpack.c.l.b16 %v99
    %v126 = vunpack.c.l.b16 %v100
    %v127 = vunpack.c.l.b16 %v101
    %v128 = vunpack.c.l.b16 %v102
    %v129 = vunpack.c.l.b16 %v103
    %v130 = vunpack.c.l.b16 %v104
    %v131 = vpack.c.b16 %v124, %v123
    %v132 = vpack.c.b16 %v126, %v125
    %v133 = vpack.c.b16 %v128, %v127
    %v134 = vpack.c.b16 %v130, %v129
    %vm135 = vcmask 523264
    %v137 = vsel %vm135, %v114, 0
    %v140 = vsel %vm135, %v131, 0
    %v143 = vsel %vm135, %v132, 0
    %v146 = vsel %vm135, %v133, 0
    %v149 = vsel %vm135, %v134, 0
    %151 = vmatpush.bf16.xpose.msra.mxu0 0
    %152 = vmatpush.bf16.xpose.msra.mxu0 0
    %153 = vmatpush.bf16.xpose.msra.mxu0 0
    %154 = vmatpush.bf16.xpose.msra.mxu0 0
    %155 = vmatpush.bf16.xpose.msra.mxu0 %v149
    %156 = vmatpush.bf16.xpose.msra.mxu0 %v146
    %157 = vmatpush.bf16.xpose.msra.mxu0 %v143
    %158 = vmatpush.bf16.xpose.msra.mxu0 %v140
    %159 = vmatmul.bf16.gmra.mxu0 %v137
    %v160 = vpop.f32.mrf.mxu0
    %v161 = vadd.f32 0.0, %v160
    %v162 = vpop.f32.mrf.mxu0
    %163 = vdwg.mxu0
    %vm164 = vcmask 517120
    %165 = vst.msk [vmem:[#allocation4] sm:$0x3] %vm164, %v161
    // Predicated region
    $region14: #{tpu_custom_call.1} parent=1 // pred_check
      _
    $region15: #{tpu_custom_call.1} parent=1 // pred_check_branch
      %167 = sbr.rel (0) target = $region17
    $region16: #{tpu_custom_call.1} parent=1 // pred_region
      %169 = vsyncadd [#allocation3], 0
      %s170 = sshll.u32 [#allocation2], 4
      %s171 = int_to_ptr.vmem [resolvable:$true] %s170
      %s172 = sshll.u32 %s3, 4
      %s173 = int_to_ptr.hbm [resolvable:$true] %s172
      %178 = dma.vmem_to_hbm [thread:$0]  %s171, 512, %s173, [#allocation3], 64, 64, 4
    $region17: #{tpu_custom_call.1} parent=1 // pred_fallthru
      _
    // Predicated region
    $region18: #{tpu_custom_call.1} parent=1 // pred_check
      _
    $region19: #{tpu_custom_call.1} parent=1 // pred_check_branch
      %180 = sbr.rel (0) target = $region21
    $region20: #{tpu_custom_call.1} parent=1 // pred_region
      %182 = vsyncadd [#allocation5], 0
      %s184 = sshll.u32 [#allocation4], 4
      %s185 = int_to_ptr.vmem [resolvable:$true] %s184
      %s186 = sshll.u32 %s4, 4
      %s187 = int_to_ptr.hbm [resolvable:$true] %s186
      %189 = dma.vmem_to_hbm [thread:$0]  %s185, 32, %s187, [#allocation5]
    $region21: #{tpu_custom_call.1} parent=1 // pred_fallthru
      _
    // Predicated region
    $region22: #{tpu_custom_call.1} parent=1 // pred_check
      _
    $region23: #{tpu_custom_call.1} parent=1 // pred_check_branch
      %191 = sbr.rel (0) target = $region25
    $region24: #{tpu_custom_call.1} parent=1 // pred_region
      %193 = dma.done [#allocation3], 512
    $region25: #{tpu_custom_call.1} parent=1 // pred_fallthru
      _
    // Predicated region
    $region26: #{tpu_custom_call.1} parent=1 // pred_check
      _
    $region27: #{tpu_custom_call.1} parent=1 // pred_check_branch
      %195 = sbr.rel (0) target = $region29
    $region28: #{tpu_custom_call.1} parent=1 // pred_region
      %197 = dma.done [#allocation5], 32
    $region29: #{tpu_custom_call.1} parent=1 // pred_fallthru
      _
    %198 = vsyncpa [#allocation3], 1
    %199 = vsyncpa [#allocation5], 1

</llo_original>
